<compile_context>
chip_gen: v7x
topology: tpu7x:2x2x1
jax: 0.10.0
libtpu: 0.0.40
codegen_flags: <defaults>
</compile_context>

<pallas_src>
import jax
import jax.numpy as jnp
from jax.experimental import pallas as pl
from jax.experimental.pallas import tpu as pltpu


def _round_up(x, m):
    return ((x + m - 1) // m) * m


def _cdiv(a, b):
    return (a + b - 1) // b


def _masked_conv_matmul_kernel(pat_ref, w_ref, b_ref, out_ref, acc_ref):
    """acc += W_masked[:, k_tile] @ pat[n, k_tile, q_tile]; finalize adds bias."""
    kt = pl.program_id(2)

    @pl.when(kt == 0)
    def _init():
        acc_ref[...] = jnp.zeros_like(acc_ref)

    acc_ref[...] += jnp.dot(w_ref[...], pat_ref[0],
                            preferred_element_type=jnp.float32)

    @pl.when(kt == pl.num_programs(2) - 1)
    def _finalize():
        out_ref[0] = (acc_ref[...] + b_ref[...]).astype(out_ref.dtype)


def channel_masked_conv2d(x, weight, bias, mask_param, *, stride=1, padding=0,
                          dilation=1, groups=1, compute_dtype=jnp.bfloat16,
                          tile_q=512, tile_k=512):
    """x: (N,C,H,W)  weight: (Cout,C,KH,KW)  bias: (Cout,) or None  mask: (C,).

    Returns (out in NCHW, latency), matching ChannelMaskedConv2d.forward.
    """
    if groups != 1:
        # TODO(synk): grouped conv not implemented in the Pallas path.
        raise NotImplementedError("groups > 1 is not supported")

    N, C, H, W = x.shape
    Cout, Cin_w, KH, KW = weight.shape
    assert Cin_w == C, (Cin_w, C)

    if padding:
        x = jnp.pad(x, ((0, 0), (0, 0), (padding, padding), (padding, padding)))
        H += 2 * padding
        W += 2 * padding

    OH = (H - dilation * (KH - 1) - 1) // stride + 1
    OW = (W - dilation * (KW - 1) - 1) // stride + 1
    Q = OH * OW          # output spatial positions (lane axis)
    K = C * KH * KW      # reduction axis (sublane axis)

    # latency = sum(sigmoid(mask)): trivial reduction, hoisted out of the kernel.
    sig = jax.nn.sigmoid(mask_param.astype(jnp.float32))            # (C,)
    latency = jnp.sum(sig)

    # --- Transposed im2col: (N, K, Q) with K ordered (c, kh, kw), Q = (oh, ow).
    # Only H/W slicing + stack/reshape: no minor-dim relayout, and the kernel
    # output (N, Cout, Q) reshapes straight back to NCHW.
    cols = []
    for kh in range(KH):
        for kw in range(KW):
            hs, ws = kh * dilation, kw * dilation
            cols.append(x[:, :, hs:hs + stride * OH:stride,
                             ws:ws + stride * OW:stride])           # (N, C, OH, OW)
    pat = jnp.stack(cols, axis=2).reshape(N, K, Q).astype(compute_dtype)

    # Fold the channel mask into the weight: x conv (diag(s) W) == (x*s) conv W.
    s_cols = jnp.repeat(sig, KH * KW)                                # (K,), (c,kh,kw) order
    w_mat = (weight.reshape(Cout, K).astype(jnp.float32) * s_cols[None, :]
             ).astype(compute_dtype)                                 # (Cout, K)
    if bias is None:
        bias = jnp.zeros((Cout,), jnp.float32)
    b_col = bias.astype(jnp.float32).reshape(Cout, 1)                # (Cout, 1)

    # --- Tiling: Q (lanes) in 128-multiples, K (sublanes) in 8-multiples.
    TILE_Q = min(_round_up(max(tile_q, 128), 128), _round_up(Q, 128))
    # Keep at least 2 parallel grid steps so v7x's second TensorCore gets work.
    while TILE_Q > 128 and N * _cdiv(Q, TILE_Q) < 2:
        TILE_Q -= 128
    Q_pad = _round_up(Q, TILE_Q)
    QT = Q_pad // TILE_Q

    TILE_K = _round_up(min(K, max(tile_k, 8)), 8)
    K_pad = _round_up(K, TILE_K)
    KT = K_pad // TILE_K

    if K_pad != K or Q_pad != Q:
        pat = jnp.pad(pat, ((0, 0), (0, K_pad - K), (0, Q_pad - Q)))
    if K_pad != K:
        w_mat = jnp.pad(w_mat, ((0, 0), (0, K_pad - K)))

    out_dtype = x.dtype
    in_item = jnp.dtype(compute_dtype).itemsize
    out_item = jnp.dtype(out_dtype).itemsize

    # Explicit per-shape VMEM budget (double-buffered streams + f32 accumulator).
    vmem_est = (2 * TILE_K * TILE_Q * in_item       # patch tile (streamed)
                + 2 * Cout * TILE_K * in_item       # masked-weight tile
                + 2 * Cout * 4                      # bias column
                + 2 * Cout * TILE_Q * out_item      # output tile
                + Cout * TILE_Q * 4)                # f32 accumulator scratch
    vmem_limit = int(min(max(2 * vmem_est + (2 << 20), 16 << 20), 48 << 20))

    cost = pl.CostEstimate(
        flops=2 * N * Q_pad * K_pad * Cout,
        transcendentals=0,
        bytes_accessed=(N * K_pad * Q_pad * in_item            # patch slab read
                        + N * QT * Cout * K_pad * in_item      # weight re-reads
                        + N * Cout * Q_pad * out_item))        # output write

    out_t = pl.pallas_call(
        _masked_conv_matmul_kernel,
        out_shape=jax.ShapeDtypeStruct((N, Cout, Q_pad), out_dtype),
        grid=(N, QT, KT),
        in_specs=[
            pl.BlockSpec((1, TILE_K, TILE_Q), lambda n, q, k: (n, k, q)),  # patches
            pl.BlockSpec((Cout, TILE_K), lambda n, q, k: (0, k)),          # masked weight
            pl.BlockSpec((Cout, 1), lambda n, q, k: (0, 0)),               # bias column
        ],
        out_specs=pl.BlockSpec((1, Cout, TILE_Q), lambda n, q, k: (n, 0, q)),
        scratch_shapes=[pltpu.VMEM((Cout, TILE_Q), jnp.float32)],
        compiler_params=pltpu.CompilerParams(
            dimension_semantics=("parallel", "parallel", "arbitrary"),
            vmem_limit_bytes=vmem_limit),
        cost_estimate=cost,
    )(pat, w_mat, b_col)

    # Padded Q columns (bias-only) are sliced off; result is already NCHW.
    out = out_t[:, :, :Q].reshape(N, Cout, OH, OW)
    return out, latency


if __name__ == "__main__":
    key = jax.random.PRNGKey(0)
    k_x, k_w, k_b = jax.random.split(key, 3)

    N, C, H, W = 2, 4, 16, 16
    Cout, KH, KW = 8, 3, 3

    x = jax.random.normal(k_x, (N, C, H, W), jnp.float32)
    fan_in = C * KH * KW
    bound = 1.0 / (fan_in ** 0.5)
    weight = jax.random.uniform(k_w, (Cout, C, KH, KW), jnp.float32, -bound, bound)
    bias = jax.random.uniform(k_b, (Cout,), jnp.float32, -bound, bound)
    mask_param = jnp.ones((C,), jnp.float32)   # matches nn.Parameter(torch.ones(C))

    # Pure-JAX reference.
    sig = jax.nn.sigmoid(mask_param)
    x_masked = x * sig.reshape(1, C, 1, 1)
    ref = jax.lax.conv_general_dilated(
        x_masked, weight, window_strides=(1, 1), padding="VALID",
        dimension_numbers=("NCHW", "OIHW", "NCHW")) + bias.reshape(1, Cout, 1, 1)
    ref_lat = jnp.sum(sig)

    # 1) f32 streamed operands: tight structural check.
    out32, lat32 = channel_masked_conv2d(x, weight, bias, mask_param,
                                         compute_dtype=jnp.float32)
    out32, lat32 = jax.block_until_ready((out32, lat32))
    assert out32.shape == (N, Cout, H - KH + 1, W - KW + 1), out32.shape
    assert jnp.allclose(out32, ref, atol=1e-4, rtol=1e-4)
    assert jnp.allclose(lat32, ref_lat, atol=1e-5)

    # 2) default fast path (bf16 streamed operands, f32 accumulation).
    out, latency = channel_masked_conv2d(x, weight, bias, mask_param)
    out, latency = jax.block_until_ready((out, latency))
    assert out.shape == (N, Cout, H - KH + 1, W - KW + 1), out.shape
    # Loose tolerance only covers bf16 operand rounding; layout/ordering bugs
    # would show up as O(1) errors.
    assert jnp.allclose(out, ref, atol=3e-2, rtol=3e-2)
    assert jnp.allclose(latency, ref_lat, atol=1e-5)
    print("KERNEL_OK")
</pallas_src>

<mosaic_0001>
module attributes {stable_mosaic.version = 11 : i64} {
  func.func @_masked_conv_matmul_kernel(%arg0: i32, %arg1: i32, %arg2: i32, %arg3: memref<1x40x256xf32, #tpu.memory_space<vmem>>, %arg4: memref<8x40xf32, #tpu.memory_space<vmem>>, %arg5: memref<8x1xf32, #tpu.memory_space<vmem>>, %arg6: memref<1x8x256xf32, #tpu.memory_space<vmem>>, %arg7: memref<8x256xf32, #tpu.memory_space<vmem>>) attributes {dimension_semantics = [#tpu.dimension_semantics<parallel>, #tpu.dimension_semantics<parallel>, #tpu.dimension_semantics<arbitrary>], iteration_bounds = array<i64: 2, 1, 1>, scalar_prefetch = 0 : i64, scratch_operands = 1 : i64, tpu.core_type = #tpu.core_type<tc>, window_params = [{transform_indices = @transform_0, window_bounds = array<i64: 1, 40, 256>}, {transform_indices = @transform_1, window_bounds = array<i64: 8, 40>}, {pipeline_mode = #tpu.pipeline_mode<synchronous>, transform_indices = @transform_2, window_bounds = array<i64: 8, 1>}, {transform_indices = @transform_3, window_bounds = array<i64: 1, 8, 256>}]} {
    %c0_i32 = arith.constant 0 : i32
    %0 = arith.cmpi eq, %arg2, %c0_i32 : i32
    %1 = arith.extui %0 : i1 to i32
    %c0_i32_0 = arith.constant 0 : i32
    %2 = arith.cmpi ne, %1, %c0_i32_0 : i32
    scf.if %2 {
      %cst_11 = arith.constant 0.000000e+00 : f32
      %13 = vector.broadcast %cst_11 : f32 to vector<8x256xf32>
      %c0_12 = arith.constant 0 : index
      %c0_13 = arith.constant 0 : index
      %14 = vector.load %arg7[%c0_12, %c0_13] : memref<8x256xf32, #tpu.memory_space<vmem>>, vector<8x256xf32>
      tpu.vector_store %arg7[%c0_12, %c0_13], %13 {strides = array<i32>} : memref<8x256xf32, #tpu.memory_space<vmem>>, vector<8x256xf32>,
    } else {
    }
    %c0 = arith.constant 0 : index
    %c0_1 = arith.constant 0 : index
    %3 = vector.load %arg7[%c0, %c0_1] : memref<8x256xf32, #tpu.memory_space<vmem>>, vector<8x256xf32>
    %c0_2 = arith.constant 0 : index
    %c0_3 = arith.constant 0 : index
    %4 = vector.load %arg4[%c0_2, %c0_3] : memref<8x40xf32, #tpu.memory_space<vmem>>, vector<8x40xf32>
    %c0_4 = arith.constant 0 : index
    %c0_5 = arith.constant 0 : index
    %c0_6 = arith.constant 0 : index
    %5 = vector.load %arg3[%c0_4, %c0_5, %c0_6] : memref<1x40x256xf32, #tpu.memory_space<vmem>>, vector<1x40x256xf32>
    %6 = vector.shape_cast %5 : vector<1x40x256xf32> to vector<40x256xf32>
    %cst = arith.constant dense<0.000000e+00> : vector<8x256xf32>
    %7 = tpu.matmul %4, %6, %cst {dimension_numbers = #tpu.dot_dimension_numbers<[1], [0], [0], [1], [0, 0, 1, 1], [], []>} : vector<8x40xf32>, vector<40x256xf32>, vector<8x256xf32> -> vector<8x256xf32>
    %8 = arith.addf %3, %7 : vector<8x256xf32>
    %c0_7 = arith.constant 0 : index
    %c0_8 = arith.constant 0 : index
    %9 = vector.load %arg7[%c0_7, %c0_8] : memref<8x256xf32, #tpu.memory_space<vmem>>, vector<8x256xf32>
    tpu.vector_store %arg7[%c0_7, %c0_8], %8 {strides = array<i32>} : memref<8x256xf32, #tpu.memory_space<vmem>>, vector<8x256xf32>,
    %c0_i32_9 = arith.constant 0 : i32
    %10 = arith.cmpi eq, %arg2, %c0_i32_9 : i32
    %11 = arith.extui %10 : i1 to i32
    %c0_i32_10 = arith.constant 0 : i32
    %12 = arith.cmpi ne, %11, %c0_i32_10 : i32
    scf.if %12 {
      %c0_11 = arith.constant 0 : index
      %c0_12 = arith.constant 0 : index
      %13 = vector.load %arg7[%c0_11, %c0_12] : memref<8x256xf32, #tpu.memory_space<vmem>>, vector<8x256xf32>
      %c0_13 = arith.constant 0 : index
      %c0_14 = arith.constant 0 : index
      %14 = vector.load %arg5[%c0_13, %c0_14] : memref<8x1xf32, #tpu.memory_space<vmem>>, vector<8x1xf32>
      %15 = vector.broadcast %14 : vector<8x1xf32> to vector<8x256xf32>
      %16 = arith.addf %13, %15 : vector<8x256xf32>
      %c0_15 = arith.constant 0 : index
      %c0_16 = arith.constant 0 : index
      %c0_17 = arith.constant 0 : index
      %17 = vector.load %arg6[%c0_15, %c0_16, %c0_17] : memref<1x8x256xf32, #tpu.memory_space<vmem>>, vector<1x8x256xf32>
      %18 = vector.shape_cast %17 : vector<1x8x256xf32> to vector<8x256xf32>
      %19 = vector.shape_cast %16 : vector<8x256xf32> to vector<1x8x256xf32>
      tpu.vector_store %arg6[%c0_15, %c0_16, %c0_17], %19 {strides = array<i32>} : memref<1x8x256xf32, #tpu.memory_space<vmem>>, vector<1x8x256xf32>,
    } else {
    }
    return
  }
  func.func @transform_0(%arg0: i32, %arg1: i32, %arg2: i32) -> (i32, i32, i32) {
    %c0_i32 = arith.constant 0 : i32
    return %arg0, %arg2, %arg1 : i32, i32, i32
  }
  func.func @transform_1(%arg0: i32, %arg1: i32, %arg2: i32) -> (i32, i32) {
    %c0_i32 = arith.constant 0 : i32
    %c0_i32_0 = arith.constant 0 : i32
    return %c0_i32, %arg2 : i32, i32
  }
  func.func @transform_2(%arg0: i32, %arg1: i32, %arg2: i32) -> (i32, i32) {
    %c0_i32 = arith.constant 0 : i32
    %c0_i32_0 = arith.constant 0 : i32
    %c0_i32_1 = arith.constant 0 : i32
    return %c0_i32, %c0_i32_0 : i32, i32
  }
  func.func @transform_3(%arg0: i32, %arg1: i32, %arg2: i32) -> (i32, i32, i32) {
    %c0_i32 = arith.constant 0 : i32
    %c0_i32_0 = arith.constant 0 : i32
    return %arg0, %c0_i32, %arg1 : i32, i32, i32
  }
}

</mosaic_0001>

<llo_original>
// kernel: tpu_custom_call.1
$region0: #{tpu_custom_call.1}
  #allocation0 [shape = 'u32[]', space=smem, size = 0x4, offset = 0x4, fixed_abs, tag = 'smem constant byte address 0x4 - core index']
  #allocation1 [shape = 'u32[144,128]{1,0:T(1,128)}', space=vmem, size = 0x12000, scoped, tag = 'internal scratch']
  #allocation2 [shape = 'f32[8,256]{1,0:T(8,128)}', space=vmem, size = 0x2000, scoped, tag = 'scratch operand']
  %s0 = inlined_call_operand.hbm [shape: f32[2,40,256], index: 0, kind: input, shape index: {}]
  %s1 = inlined_call_operand.vmem [shape: f32[8,40], index: 1, kind: input, shape index: {}]
  %s2 = inlined_call_operand.vmem [shape: f32[8,1], index: 2, kind: input, shape index: {}]
  %s3 = inlined_call_operand.hbm [shape: f32[2,8,256], index: 3, kind: output, shape index: {}]
  %s4 = sld [smem:[#allocation0]]
  $region57: #{tpu_custom_call.1} parent=0
    _
  %s6 = ssub.s32 1, %s4
  %s7 = scalar_select 0, %s6, %s4
  $region1: #{tpu_custom_call.1} parent=0
    #allocation3 [shape = 'u8[81920]{0}', space=vmem, size = 0x14000, scoped, tag = 'input window, operand 0']
    #allocation4 [shape = 's32[2]{0}', space=sflag, size = 0x8, scoped, tag = 'scoped memory for tpu_custom_call.1']
    #allocation5 [shape = 's32[2]{0}', space=sflag, size = 0x8, scoped, tag = 'scoped memory for tpu_custom_call.1']
    #allocation6 [shape = 'u8[16384]{0}', space=vmem, size = 0x4000, scoped, tag = 'output window, operand 0']
    %8 = vsyncpa [#allocation4], 0
    %s9 = scalar_lea.sflag [#allocation4], 1
    %10 = vsyncpa %s9, 0
    %11 = vsyncpa [#allocation5], 0
    %s12 = scalar_lea.sflag [#allocation5], 1
    %13 = vsyncpa %s12, 0
    loop: start=0, step=1, limit=4
    $region2: #{tpu_custom_call.1} parent=1 // loop_pre_header
      _
    $region3: #{tpu_custom_call.1} parent=1 // loop_header
      %s15 = sphi 0, %s19
      %p16 = scmp.ge.s32.totalorder %s15, 4
      %s22 = sphi 0, %s41
      %s23 = sphi 0, %s37
      %s24 = sphi 0, %s33
      %s25 = sphi 0, %s22
      %s26 = sphi 0, %s23
      %s27 = sphi 0, %s24
      %s28 = sphi 0, %s25
      %s29 = sphi 0, %s26
      %s30 = sphi 0, %s27
      %s48 = sphi 0, %s50
      %s51 = sphi 0, %s48
      %s52 = sphi 0, %s51
      %s68 = sphi 0, %s52
      %s74 = sphi 0, %s76
      %s77 = sphi 0, %s74
      %s78 = sphi 0, %s77
      %s94 = sphi 0, %s78
      %s98 = sphi 0, %s98
      %s100 = sphi 0, %s98
      %s101 = sphi 0, %s100
      %s115 = sphi 0, %s101
      %s123 = sphi 0, %s125
      %s126 = sphi 0, %s123
      %s127 = sphi 0, %s126
      %s143 = sphi 0, %s127
    $region4: #{tpu_custom_call.1} parent=1 // loop_header_branch
      %18 = sbr.rel (%p16) target = $region8
    $region5: #{tpu_custom_call.1} parent=1 // loop_body
      %s20 = ssub.s32 %s15, 1
      %s21 = ssub.s32 %s15, 2
      %s31 = sadd.s32 1, %s24
      %p32 = scmp.ge.s32.totalorder %s31, 1
      %s33 = scalar_select %p32, 0, %s31
      %s34 = sadd.s32 1, %s23
      %s35 = scalar_select %p32, %s34, %s23
      %p36 = scmp.ge.s32.totalorder %s35, 1
      %s37 = scalar_select %p36, 0, %s35
      %s38 = sadd.s32 1, %s22
      %s39 = scalar_select %p36, %s38, %s22
      %p40 = scmp.ge.s32.totalorder %s39, 2
      %s41 = scalar_select %p40, 0, %s39
      %s42 = ssub.s32 %s22, %s41
      %s43 = ssub.s32 %s24, %s33
      %s44 = sor.u32 %s42, %s43
      %s45 = ssub.s32 %s23, %s37
      %s46 = sor.u32 %s44, %s45
      %p47 = scmp.eq.s32.totalorder %s46, 0
      %s49 = sadd.s32 %s48, 1
      %s50 = scalar_select %p47, %s48, %s49
      %p53 = pneg %p47
      %p54 = scmp.eq.s32.totalorder %s15, 1
      %p55 = por %p53, %p54
      %p56 = scmp.ne.s32.totalorder %s48, %s51
      %p57 = scmp.eq.s32.totalorder %s15, 0
      %p58 = por %p56, %p57
      %p59 = scmp.ne.s32.totalorder %s48, %s51
      %p60 = scmp.eq.s32.totalorder %s20, 1
      %p61 = por %p59, %p60
      %p62 = scmp.ne.s32.totalorder %s51, %s52
      %p63 = scmp.eq.s32.totalorder %s20, 0
      %p64 = por %p62, %p63
      %p65 = scmp.ne.s32.totalorder %s51, %s52
      %p66 = scmp.eq.s32.totalorder %s21, 1
      %p67 = por %p65, %p66
      %p69 = scmp.ne.s32.totalorder %s52, %s68
      %p70 = scmp.eq.s32.totalorder %s21, 0
      %p71 = por %p69, %p70
      %s72 = ssub.s32 %s24, %s33
      %p73 = scmp.eq.s32.totalorder %s72, 0
      %s75 = sadd.s32 %s74, 1
      %s76 = scalar_select %p73, %s74, %s75
      %p79 = pneg %p73
      %p80 = scmp.eq.s32.totalorder %s15, 1
      %p81 = por %p79, %p80
      %p82 = scmp.ne.s32.totalorder %s74, %s77
      %p83 = scmp.eq.s32.totalorder %s15, 0
      %p84 = por %p82, %p83
      %p85 = scmp.ne.s32.totalorder %s74, %s77
      %p86 = scmp.eq.s32.totalorder %s20, 1
      %p87 = por %p85, %p86
      %p88 = scmp.ne.s32.totalorder %s77, %s78
      %p89 = scmp.eq.s32.totalorder %s20, 0
      %p90 = por %p88, %p89
      %p91 = scmp.ne.s32.totalorder %s77, %s78
      %p92 = scmp.eq.s32.totalorder %s21, 1
      %p93 = por %p91, %p92
      %p95 = scmp.ne.s32.totalorder %s78, %s94
      %p96 = scmp.eq.s32.totalorder %s21, 0
      %p97 = por %p95, %p96
      %s99 = sadd.s32 %s98, 1
      %p102 = scmp.eq.s32.totalorder %s15, 1
      %p103 = scmp.ne.s32.totalorder %s98, %s100
      %p104 = scmp.eq.s32.totalorder %s15, 0
      %p105 = por %p103, %p104
      %p106 = scmp.ne.s32.totalorder %s98, %s100
      %p107 = scmp.eq.s32.totalorder %s20, 1
      %p108 = por %p106, %p107
      %p109 = scmp.ne.s32.totalorder %s100, %s101
      %p110 = scmp.eq.s32.totalorder %s20, 0
      %p111 = por %p109, %p110
      %p112 = scmp.ne.s32.totalorder %s100, %s101
      %p113 = scmp.eq.s32.totalorder %s21, 1
      %p114 = por %p112, %p113
      %p116 = scmp.ne.s32.totalorder %s101, %s115
      %p117 = scmp.eq.s32.totalorder %s21, 0
      %p118 = por %p116, %p117
      %s119 = ssub.s32 %s22, %s41
      %s120 = ssub.s32 %s23, %s37
      %s121 = sor.u32 %s119, %s120
      %p122 = scmp.eq.s32.totalorder %s121, 0
      %s124 = sadd.s32 %s123, 1
      %s125 = scalar_select %p122, %s123, %s124
      %p128 = pneg %p122
      %p129 = scmp.eq.s32.totalorder %s15, 1
      %p130 = por %p128, %p129
      %p131 = scmp.ne.s32.totalorder %s123, %s126
      %p132 = scmp.eq.s32.totalorder %s15, 0
      %p133 = por %p131, %p132
      %p134 = scmp.ne.s32.totalorder %s123, %s126
      %p135 = scmp.eq.s32.totalorder %s20, 1
      %p136 = por %p134, %p135
      %p137 = scmp.ne.s32.totalorder %s126, %s127
      %p138 = scmp.eq.s32.totalorder %s20, 0
      %p139 = por %p137, %p138
      %p140 = scmp.ne.s32.totalorder %s126, %s127
      %p141 = scmp.eq.s32.totalorder %s21, 1
      %p142 = por %p140, %p141
      %p144 = scmp.ne.s32.totalorder %s127, %s143
      %p145 = scmp.eq.s32.totalorder %s21, 0
      %p146 = por %p144, %p145
      %p147 = scmp.le.s32.totalorder 1, %s15
      %p148 = scmp.lt.s32.totalorder %s15, 3
      %p149 = pnand %p147, %p148
      %p150 = pneg %p149
      // Predicated region
      $region9: #{tpu_custom_call.1} parent=5 // pred_check
        _
      $region10: #{tpu_custom_call.1} parent=5 // pred_check_branch
        %152 = sbr.rel (%p149) target = $region12
      $region11: #{tpu_custom_call.1} parent=5 // pred_region
        %s153 = ssub.s32 %s15, 1
        // Predicated region
        $region13: #{tpu_custom_call.1} parent=11 // pred_check
          %p154 = pneg %p90
        $region14: #{tpu_custom_call.1} parent=11 // pred_check_branch
          %156 = sbr.rel (%p154) target = $region16
        $region15: #{tpu_custom_call.1} parent=11 // pred_region
          %p157 = scmp.lt.s32.totalorder %s27, 0
          %s158 = scalar_select %p157, %s27, 0
          %s159 = smul.addr %s158, 8
          %s160 = scalar_lea.vmem %s1, %s159
        $region16: #{tpu_custom_call.1} parent=11 // pred_fallthru
          _
        // Predicated region
        $region17: #{tpu_custom_call.1} parent=11 // pred_check
          %p161 = pneg %p111
        $region18: #{tpu_custom_call.1} parent=11 // pred_check_branch
          %163 = sbr.rel (%p161) target = $region20
        $region19: #{tpu_custom_call.1} parent=11 // pred_region
          _
        $region20: #{tpu_custom_call.1} parent=11 // pred_fallthru
          _
      $region12: #{tpu_custom_call.1} parent=5 // pred_fallthru
        _
      %p164 = scmp.lt.s32.totalorder %s15, 2
      // Predicated region
      $region21: #{tpu_custom_call.1} parent=5 // pred_check
        %p165 = pneg %p164
      $region22: #{tpu_custom_call.1} parent=5 // pred_check_branch
        %167 = sbr.rel (%p165) target = $region24
      $region23: #{tpu_custom_call.1} parent=5 // pred_region
        // Predicated region
        $region25: #{tpu_custom_call.1} parent=23 // pred_check
          %p168 = pneg %p58
        $region26: #{tpu_custom_call.1} parent=23 // pred_check_branch
          %170 = sbr.rel (%p168) target = $region28
        $region27: #{tpu_custom_call.1} parent=23 // pred_region
          %s171 = sand.u32 %s48, 1
          %s172 = scalar_lea.sflag [#allocation4], %s171
          %s173 = sand.u32 %s48, 1
          %s174 = smul.addr %s173, 80
          %s175 = scalar_lea.vmem [#allocation3], %s174
          %s176 = smul.u32 5, %s24
          %s177 = smul.u32 2, %s23
          %s179 = ssub.s32 1280, 1280
          %180 = vsyncadd %s172, %s179
          %s181 = smul.addr %s176, 2
          %s182 = sadd.s32 %s177, %s181
          %s183 = smul.addr %s22, 10
          %s184 = sadd.s32 %s182, %s183
          %s185 = smul.addr %s184, 128
          %s186 = scalar_lea.hbm %s0, %s185
          %s187 = sshll.u32 %s175, 4
          %s188 = int_to_ptr.vmem [resolvable:$true] %s187
          %193 = dma.hbm_to_vmem [thread:$0]  %s186, 1280, %s188, %s172, 256, 256, 16
        $region28: #{tpu_custom_call.1} parent=23 // pred_fallthru
          _
      $region24: #{tpu_custom_call.1} parent=5 // pred_fallthru
        _
      %p194 = scmp.le.s32.totalorder 1, %s15
      %p195 = scmp.lt.s32.totalorder %s15, 3
      %p196 = pnand %p194, %p195
      %p197 = pneg %p196
      // Predicated region
      $region29: #{tpu_custom_call.1} parent=5 // pred_check
        _
      $region30: #{tpu_custom_call.1} parent=5 // pred_check_branch
        %199 = sbr.rel (%p196) target = $region32
      $region31: #{tpu_custom_call.1} parent=5 // pred_region
        %s200 = ssub.s32 %s15, 1
        %s201 = sand.u32 %s51, 1
        %s202 = scalar_lea.sflag [#allocation4], %s201
        %s203 = sand.u32 %s51, 1
        %s204 = smul.addr %s203, 80
        %s205 = scalar_lea.vmem [#allocation3], %s204
        // Predicated region
        $region33: #{tpu_custom_call.1} parent=31 // pred_check
          %p206 = pneg %p64
        $region34: #{tpu_custom_call.1} parent=31 // pred_check_branch
          %208 = sbr.rel (%p206) target = $region36
        $region35: #{tpu_custom_call.1} parent=31 // pred_region
          %209 = dma.done %s202, 1280
        $region36: #{tpu_custom_call.1} parent=31 // pred_fallthru
          _
        %s210 = sand.u32 %s51, 1
        %s211 = scalar_lea.sflag [#allocation4], %s210
        %s212 = sand.u32 %s51, 1
        %s213 = smul.addr %s212, 80
        %s214 = scalar_lea.vmem [#allocation3], %s213
        %p215 = pneg %p64
        %p216 = pneg %p61
        %p217 = scmp.lt.s32.totalorder %s27, 0
        %s218 = scalar_select %p217, %s27, 0
        %s219 = smul.addr %s218, 8
        %s220 = scalar_lea.vmem %s1, %s219
        %p221 = pneg %p90
        %p222 = pneg %p87
        %p223 = pneg %p111
        %p224 = pneg %p108
        %p225 = pneg %p139
        %p226 = pneg %p136
        %s227 = sand.u32 %s126, 1
        %s228 = scalar_lea.sflag [#allocation5], %s227
        %s229 = sand.u32 %s126, 1
        %s230 = smul.addr %s229, 16
        %s231 = scalar_lea.vmem [#allocation6], %s230
        %s232 = smul.u32 5, %s27
        %s233 = smul.u32 2, %s26
        %p234 = scmp.lt.s32.totalorder %s27, 0
        %s235 = scalar_select %p234, %s27, 0
        %s236 = smul.addr %s235, 8
        %s237 = scalar_lea.vmem %s1, %s236
        %s238 = smul.u32 2, %s26
        %p239 = scmp.eq.s32.totalorder %s27, 0
        // Predicated region
        $region37: #{tpu_custom_call.1} parent=31 // pred_check
          %p240 = pneg %p239
        $region38: #{tpu_custom_call.1} parent=31 // pred_check_branch
          %242 = sbr.rel (%p240) target = $region40
        $region39: #{tpu_custom_call.1} parent=31 // pred_region
          %243 = vst [vmem:[#allocation2] sm:$0xff] 0.0
          %244 = vst [vmem:[#allocation2 + $0x8] sm:$0xff] 0.0
        $region40: #{tpu_custom_call.1} parent=31 // pred_fallthru
          _
        %v245 = vld [vmem:[#allocation2] sm:$0xff]
        %v246 = vld [vmem:[#allocation2 + $0x8] sm:$0xff]
        %v247 = vld [vmem:[%s237] sm:$0xff]
        %v248 = vld [vmem:[%s205] sm:$0xff]
        %v249 = vld [vmem:[%s205 + $0x8] sm:$0xff]
        %v250 = vld [vmem:[%s205 + $0x10] sm:$0xff]
        %v251 = vld [vmem:[%s205 + $0x18] sm:$0xff]
        %v252 = vld [vmem:[%s205 + $0x20] sm:$0xff]
        %v253 = vld [vmem:[%s205 + $0x28] sm:$0xff]
        %v254 = vld [vmem:[%s205 + $0x30] sm:$0xff]
        %v255 = vld [vmem:[%s205 + $0x38] sm:$0xff]
        %v256 = vld [vmem:[%s205 + $0x40] sm:$0xff]
        %v257 = vld [vmem:[%s205 + $0x48] sm:$0xff]
        %vm258 = vcmask 326656
        %v260 = vsel %vm258, %v247, 0
        %262 = vmatprep.subr.mxu0 %v249
        %263 = vmatpush1.msra.mxu0 %v248
        %264 = vmatprep.subr.mxu0 %v251
        %265 = vmatpush1.msra.mxu0 %v250
        %266 = vmatprep.subr.mxu0 %v253
        %267 = vmatpush1.msra.mxu0 %v252
        %268 = vmatprep.subr.mxu0 %v255
        %269 = vmatpush1.msra.mxu0 %v254
        %270 = vmatprep.subr.mxu0 %v257
        %271 = vmatpush1.msra.mxu0 %v256
        %272 = vmatprep.subr.mxu0 0.0
        %273 = vmatpush1.msra.mxu0 0.0
        %274 = vmatprep.subr.mxu0 0.0
        %275 = vmatpush1.msra.mxu0 0.0
        %276 = vmatprep.subr.mxu0 0.0
        %277 = vmatpush1.msra.mxu0 0.0
        %278 = vmatprep.subr.mxu0 0.0
        %279 = vmatpush1.msra.mxu0 0.0
        %280 = vmatprep.subr.mxu0 0.0
        %281 = vmatpush1.msra.mxu0 0.0
        %282 = vmatprep.subr.mxu0 0.0
        %283 = vmatpush1.msra.mxu0 0.0
        %284 = vmatprep.subr.mxu0 0.0
        %285 = vmatpush1.msra.mxu0 0.0
        %286 = vmatprep.subr.mxu0 0.0
        %287 = vmatpush1.msra.mxu0 0.0
        %288 = vmatprep.subr.mxu0 0.0
        %289 = vmatpush1.msra.mxu0 0.0
        %290 = vmatprep.subr.mxu0 0.0
        %291 = vmatpush1.msra.mxu0 0.0
        %292 = vmatprep.subr.mxu0 0.0
        %293 = vmatpush1.msra.mxu0 0.0
        %294 = vmatprep.subr.mxu0 0.0
        %295 = vmatpush1.msra.mxu0 0.0
        %296 = vmatprep.subr.mxu0 0.0
        %297 = vmatpush1.msra.mxu0 0.0
        %298 = vmatprep.subr.mxu0 0.0
        %299 = vmatpush1.msra.mxu0 0.0
        %300 = vmatprep.subr.mxu0 0.0
        %301 = vmatpush1.msra.mxu0 0.0
        %302 = vmatprep.subr.mxu0 0.0
        %303 = vmatpush1.msra.mxu0 0.0
        %304 = vmatprep.subr.mxu0 0.0
        %305 = vmatpush1.msra.mxu0 0.0
        %306 = vmatprep.subr.mxu0 0.0
        %307 = vmatpush1.msra.mxu0 0.0
        %308 = vmatprep.subr.mxu0 0.0
        %309 = vmatpush1.msra.mxu0 0.0
        %310 = vmatprep.subr.mxu0 0.0
        %311 = vmatpush1.msra.mxu0 0.0
        %312 = vmatprep.subr.mxu0 0.0
        %313 = vmatpush1.msra.mxu0 0.0
        %314 = vmatprep.subr.mxu0 0.0
        %315 = vmatpush1.msra.mxu0 0.0
        %316 = vmatprep.subr.mxu0 0.0
        %317 = vmatpush1.msra.mxu0 0.0
        %318 = vmatprep.subr.mxu0 0.0
        %319 = vmatpush1.msra.mxu0 0.0
        %320 = vmatprep.subr.mxu0 0.0
        %321 = vmatpush1.msra.mxu0 0.0
        %322 = vmatprep.subr.mxu0 0.0
        %323 = vmatpush1.msra.mxu0 0.0
        %324 = vmatprep.subr.mxu0 0.0
        %325 = vmatpush1.msra.mxu0 0.0
        %326 = vmatprep.mubr.f32.mxu0 0.0
        %327 = vmatmul.mubr.f32.gmra.mrb[0].mxu0 %v260
        %v328 = vpop.f32.mrb[0].mxu0
        %v329 = vadd.f32 0.0, %v328
        %v330 = vpop.f32.mrb[0].mxu0
        %v331 = vadd.f32 0.0, %v330
        %332 = vdwg.mxu0
        %v333 = vadd.f32 %v245, %v329
        %v334 = vadd.f32 %v246, %v331
        %335 = vst [vmem:[#allocation2] sm:$0xff] %v333
        %336 = vst [vmem:[#allocation2 + $0x8] sm:$0xff] %v334
        // Predicated region
        $region41: #{tpu_custom_call.1} parent=31 // pred_check
          %p337 = pneg %p239
        $region42: #{tpu_custom_call.1} parent=31 // pred_check_branch
          %339 = sbr.rel (%p337) target = $region44
        $region43: #{tpu_custom_call.1} parent=31 // pred_region
          %v340 = vld [vmem:[#allocation2] sm:$0xff]
          %v341 = vld [vmem:[#allocation2 + $0x8] sm:$0xff]
          %v342 = vld [vmem:[%s2] sm:$0xff]
          %344 = vset.pattern.permute.xlu0 0
          %345 = vperm.xlu0 %344, %v342
          %v346 = vpop.permute.xlu0 %345
          %v348 = vadd.f32 %v340, %v346
          %v349 = vadd.f32 %v341, %v346
          %350 = vst [vmem:[%s231] sm:$0xff] %v348
          %351 = vst [vmem:[%s231 + $0x8] sm:$0xff] %v349
        $region44: #{tpu_custom_call.1} parent=31 // pred_fallthru
          _
        %s352 = sand.u32 %s126, 1
        %s353 = scalar_lea.sflag [#allocation5], %s352
        %s354 = sand.u32 %s126, 1
        %s355 = smul.addr %s354, 16
        %s356 = scalar_lea.vmem [#allocation6], %s355
        // Predicated region
        $region45: #{tpu_custom_call.1} parent=31 // pred_check
          %p357 = pneg %p136
        $region46: #{tpu_custom_call.1} parent=31 // pred_check_branch
          %359 = sbr.rel (%p357) target = $region48
        $region47: #{tpu_custom_call.1} parent=31 // pred_region
          %s360 = smul.u32 2, %s26
          %s362 = ssub.s32 256, 256
          %363 = vsyncadd %s353, %s362
          %s364 = smul.addr %s25, 2
          %s365 = sadd.s32 %s360, %s364
          %s366 = smul.addr %s365, 128
          %s367 = scalar_lea.hbm %s3, %s366
          %s369 = sshll.u32 %s356, 4
          %s370 = int_to_ptr.vmem [resolvable:$true] %s369
          %372 = dma.vmem_to_hbm [thread:$0]  %s370, 256, %s367, %s353
        $region48: #{tpu_custom_call.1} parent=31 // pred_fallthru
          _
      $region32: #{tpu_custom_call.1} parent=5 // pred_fallthru
        _
      %p373 = scmp.le.s32.totalorder 2, %s15
      // Predicated region
      $region49: #{tpu_custom_call.1} parent=5 // pred_check
        %p374 = pneg %p373
      $region50: #{tpu_custom_call.1} parent=5 // pred_check_branch
        %376 = sbr.rel (%p374) target = $region52
      $region51: #{tpu_custom_call.1} parent=5 // pred_region
        %s377 = ssub.s32 %s15, 2
        // Predicated region
        $region53: #{tpu_custom_call.1} parent=51 // pred_check
          %p378 = pneg %p142
        $region54: #{tpu_custom_call.1} parent=51 // pred_check_branch
          %380 = sbr.rel (%p378) target = $region56
        $region55: #{tpu_custom_call.1} parent=51 // pred_region
          %s381 = sand.u32 %s127, 1
          %s382 = scalar_lea.sflag [#allocation5], %s381
          %s383 = sand.u32 %s127, 1
          %s384 = smul.addr %s383, 16
          %s385 = scalar_lea.vmem [#allocation6], %s384
          %386 = dma.done %s382, 256
        $region56: #{tpu_custom_call.1} parent=51 // pred_fallthru
          _
      $region52: #{tpu_custom_call.1} parent=5 // pred_fallthru
        _
    $region6: #{tpu_custom_call.1} parent=1 // loop_footer
      %s19 = sadd.s32 1, %s15
    $region7: #{tpu_custom_call.1} parent=1 // loop_footer_branch
      %14 = sbr.rel target = $region3
    $region8: #{tpu_custom_call.1} parent=1 // loop_exit
      _
    %387 = vsyncpa [#allocation4], 1
    %s388 = scalar_lea.sflag [#allocation4], 1
    %389 = vsyncpa %s388, 1
    %390 = vsyncpa [#allocation5], 1
    %s391 = scalar_lea.sflag [#allocation5], 1
    %392 = vsyncpa %s391, 1

</llo_original>
